<compile_context>
chip_gen: v5e
topology: v5e:2x2
jax: 0.10.0
libtpu: 0.0.40
codegen_flags: <defaults>
</compile_context>

<pallas_src>
import jax
import jax.numpy as jnp
from jax import lax
from jax.experimental import pallas as pl
from jax.experimental.pallas import tpu as pltpu

SIGMA = 0.2
INV_DEM = 1.0 / (2.0 * SIGMA * SIGMA)   # 12.5 — multiply instead of divide


def fusion_mask_kernel(mu_ref, xc_ref, xu_ref, xd_ref, o_ref, lum_pad_ref):
    # xc_ref: (3, TH, W) centre tile; xu_ref/xd_ref: (3, 8, W) halo bands.
    # o_ref: (TH, W); lum_pad_ref: (TH + 16, W) f32 VMEM scratch; mu_ref: (1,) SMEM.
    i = pl.program_id(1)
    n_h = pl.num_programs(1)
    TH, W = o_ref.shape

    # Per-channel loads straight from the ref (no (3, TH, W) temporary).
    r = xc_ref[0].astype(jnp.float32)
    g = xc_ref[1].astype(jnp.float32)
    b = xc_ref[2].astype(jnp.float32)

    # --- luminance (Rec.709) ---
    lum = 0.2126 * r + 0.7152 * g + 0.0722 * b

    # Halo luminance rows: image row i*TH - 1 (above) and (i+1)*TH (below).
    lum_n = (0.2126 * xu_ref[0, 7:8, :].astype(jnp.float32)
             + 0.7152 * xu_ref[1, 7:8, :].astype(jnp.float32)
             + 0.0722 * xu_ref[2, 7:8, :].astype(jnp.float32))
    lum_s = (0.2126 * xd_ref[0, 0:1, :].astype(jnp.float32)
             + 0.7152 * xd_ref[1, 0:1, :].astype(jnp.float32)
             + 0.0722 * xd_ref[2, 0:1, :].astype(jnp.float32))
    # Zero padding at the image top / bottom borders.
    lum_n = lum_n * jnp.where(i > 0, 1.0, 0.0)
    lum_s = lum_s * jnp.where(i < n_h - 1, 1.0, 0.0)

    # --- vertical neighbours via a zero-padded VMEM scratch + shifted row slices
    #     (uses load/store slots instead of sublane XLU rolls). Layout:
    #     row 7 = north halo, rows 8..TH+7 = lum, row TH+8 = south halo.
    lum_pad_ref[8:TH + 8, :] = lum
    lum_pad_ref[7:8, :] = lum_n
    lum_pad_ref[TH + 8:TH + 9, :] = lum_s
    north = lum_pad_ref[7:TH + 7, :]
    south = lum_pad_ref[9:TH + 9, :]

    # --- horizontal neighbours via NON-NEGATIVE lane rolls + border masks ---
    col = lax.broadcasted_iota(jnp.int32, (TH, W), 1)
    west = jnp.where(col > 0, pltpu.roll(lum, shift=1, axis=1), 0.0)
    east = jnp.where(col < W - 1, pltpu.roll(lum, shift=W - 1, axis=1), 0.0)

    # --- |Laplacian| ---
    t = jnp.abs(north + south + west + east - 4.0 * lum)

    # --- saturation: population std over the RGB channels ---
    mean = (r + g + b) * (1.0 / 3.0)
    var = ((r - mean) ** 2 + (g - mean) ** 2 + (b - mean) ** 2) * (1.0 / 3.0)
    s = jnp.sqrt(var)

    # --- well-exposedness ---
    mu = mu_ref[0]
    e = jnp.exp(-jnp.square(lum - mu) * INV_DEM)

    o_ref[...] = (t * s * e).astype(o_ref.dtype)


def _pick_tile_h(H, W, itemsize, budget_bytes=20 * 1024 * 1024):
    """Largest TH (multiple of 8, divides H) whose double-buffered working set
    fits a conservative VMEM budget (safe on v5e / v6e / v7x defaults)."""
    th = min(H, 512)
    th -= th % 8
    while th >= 8:
        if H % th == 0:
            in_b = 3 * th * W * itemsize
            halo_b = 2 * 3 * 8 * W * itemsize
            out_b = th * W * itemsize
            scratch_b = (th + 16) * W * 4
            if 2 * (in_b + halo_b + out_b) + scratch_b <= budget_bytes:
                return th
        th -= 8
    return H  # tiny images: one tile per image


def fusion_mask(x, mu, *, tile_h=None):
    N, C, H, W = x.shape
    assert C == 3, "FusionMask expects a 3-channel (RGB) NCHW input"
    assert H % 8 == 0, "H must be a multiple of 8"
    itemsize = jnp.dtype(x.dtype).itemsize
    th = tile_h if tile_h is not None else _pick_tile_h(H, W, itemsize)
    assert th % 8 == 0 and H % th == 0, "tile_h must be a multiple of 8 dividing H"
    n_h = H // th
    thb = th // 8          # tile height in units of 8-row halo blocks
    hb = H // 8            # total number of 8-row halo blocks

    def center_map(n, i):
        return (n, 0, i, 0)

    def up_map(n, i):       # 8-row block whose last row is image row i*th - 1
        return (n, 0, jnp.maximum(i * thb - 1, 0), 0)

    def down_map(n, i):     # 8-row block whose first row is image row (i+1)*th
        return (n, 0, jnp.minimum((i + 1) * thb, hb - 1), 0)

    return pl.pallas_call(
        fusion_mask_kernel,
        out_shape=jax.ShapeDtypeStruct((N, 1, H, W), x.dtype),
        grid=(N, n_h),
        in_specs=[
            pl.BlockSpec(memory_space=pltpu.MemorySpace.SMEM),        # mu buffer
            pl.BlockSpec((None, 3, th, W), center_map),               # centre tile
            pl.BlockSpec((None, 3, 8, W), up_map),                    # north halo band
            pl.BlockSpec((None, 3, 8, W), down_map),                  # south halo band
        ],
        out_specs=pl.BlockSpec((None, None, th, W), lambda n, i: (n, 0, i, 0)),
        scratch_shapes=[pltpu.VMEM((th + 16, W), jnp.float32)],
        compiler_params=pltpu.CompilerParams(
            dimension_semantics=("parallel", "parallel"),   # N and H-tiles both parallel
            vmem_limit_bytes=32 * 1024 * 1024),
        cost_estimate=pl.CostEstimate(
            flops=int(30 * N * H * W),
            transcendentals=int(2 * N * H * W),
            bytes_accessed=int(4 * N * H * W * itemsize)),
    )(mu, x, x, x)


def fusion_mask_ref(x, mu):
    # Pure-JAX reference for validation.
    r, g, b = x[:, 0], x[:, 1], x[:, 2]
    lum = 0.2126 * r + 0.7152 * g + 0.0722 * b
    lp = jnp.pad(lum, ((0, 0), (1, 1), (1, 1)))
    grad = (lp[:, :-2, 1:-1] + lp[:, 2:, 1:-1]
            + lp[:, 1:-1, :-2] + lp[:, 1:-1, 2:] - 4.0 * lum)
    t = jnp.abs(grad)
    mean = (r + g + b) / 3.0
    s = jnp.sqrt(((r - mean) ** 2 + (g - mean) ** 2 + (b - mean) ** 2) / 3.0)
    e = jnp.exp(-jnp.square(lum - mu[0]) / (2.0 * SIGMA * SIGMA))
    return (t * s * e)[:, None]


if __name__ == "__main__":
    key = jax.random.PRNGKey(0)
    mu = jnp.full((1,), 0.5, dtype=jnp.float32)   # non-trainable buffer = 0.5

    # Case 1: lane-dense small image, auto tile size (single H tile).
    x1 = jax.random.uniform(key, (2, 3, 16, 256), dtype=jnp.float32)
    out1 = jax.block_until_ready(fusion_mask(x1, mu))
    ref1 = fusion_mask_ref(x1, mu)
    assert out1.shape == (2, 1, 16, 256)
    assert jnp.allclose(out1, ref1, atol=1e-5, rtol=1e-5), "mismatch vs reference (case 1)"

    # Case 2: force H tiling (tile_h=8 -> 4 tiles) to exercise halo / seam handling.
    x2 = jax.random.uniform(jax.random.PRNGKey(0), (2, 3, 32, 128), dtype=jnp.float32)
    out2 = jax.block_until_ready(fusion_mask(x2, mu, tile_h=8))
    ref2 = fusion_mask_ref(x2, mu)
    assert out2.shape == (2, 1, 32, 128)
    assert jnp.allclose(out2, ref2, atol=1e-5, rtol=1e-5), "mismatch vs reference (case 2)"

    print("KERNEL_OK")
</pallas_src>

<mosaic_0001>
module attributes {stable_mosaic.version = 11 : i64} {
  func.func @fusion_mask_kernel(%arg0: i32, %arg1: i32, %arg2: memref<1xf32, #tpu.memory_space<smem>>, %arg3: memref<1x3x16x256xf32, #tpu.memory_space<vmem>>, %arg4: memref<1x3x8x256xf32, #tpu.memory_space<vmem>>, %arg5: memref<1x3x8x256xf32, #tpu.memory_space<vmem>>, %arg6: memref<1x1x16x256xf32, #tpu.memory_space<vmem>>, %arg7: memref<32x256xf32, #tpu.memory_space<vmem>>) attributes {dimension_semantics = [#tpu.dimension_semantics<parallel>, #tpu.dimension_semantics<parallel>], iteration_bounds = array<i64: 2, 1>, scalar_prefetch = 0 : i64, scratch_operands = 1 : i64, tpu.core_type = #tpu.core_type<tc>, window_params = [{transform_indices = @transform_0, window_bounds = array<i64: 1>}, {transform_indices = @transform_1, window_bounds = array<i64: 1, 3, 16, 256>}, {transform_indices = @transform_2, window_bounds = array<i64: 1, 3, 8, 256>}, {transform_indices = @transform_3, window_bounds = array<i64: 1, 3, 8, 256>}, {transform_indices = @transform_4, window_bounds = array<i64: 1, 1, 16, 256>}]} {
    %c0 = arith.constant 0 : index
    %c0_0 = arith.constant 0 : index
    %c0_1 = arith.constant 0 : index
    %c0_2 = arith.constant 0 : index
    %0 = vector.load %arg3[%c0, %c0_0, %c0_1, %c0_2] : memref<1x3x16x256xf32, #tpu.memory_space<vmem>>, vector<1x1x16x256xf32>
    %1 = vector.shape_cast %0 : vector<1x1x16x256xf32> to vector<16x256xf32>
    %c0_3 = arith.constant 0 : index
    %c1 = arith.constant 1 : index
    %c0_4 = arith.constant 0 : index
    %c0_5 = arith.constant 0 : index
    %2 = vector.load %arg3[%c0_3, %c1, %c0_4, %c0_5] : memref<1x3x16x256xf32, #tpu.memory_space<vmem>>, vector<1x1x16x256xf32>
    %3 = vector.shape_cast %2 : vector<1x1x16x256xf32> to vector<16x256xf32>
    %c0_6 = arith.constant 0 : index
    %c2 = arith.constant 2 : index
    %c0_7 = arith.constant 0 : index
    %c0_8 = arith.constant 0 : index
    %4 = vector.load %arg3[%c0_6, %c2, %c0_7, %c0_8] : memref<1x3x16x256xf32, #tpu.memory_space<vmem>>, vector<1x1x16x256xf32>
    %5 = vector.shape_cast %4 : vector<1x1x16x256xf32> to vector<16x256xf32>
    %cst = arith.constant 2.126000e-01 : f32
    %6 = vector.broadcast %cst : f32 to vector<16x256xf32>
    %7 = arith.mulf %6, %1 : vector<16x256xf32>
    %cst_9 = arith.constant 7.152000e-01 : f32
    %8 = vector.broadcast %cst_9 : f32 to vector<16x256xf32>
    %9 = arith.mulf %8, %3 : vector<16x256xf32>
    %10 = arith.addf %7, %9 : vector<16x256xf32>
    %cst_10 = arith.constant 7.220000e-02 : f32
    %11 = vector.broadcast %cst_10 : f32 to vector<16x256xf32>
    %12 = arith.mulf %11, %5 : vector<16x256xf32>
    %13 = arith.addf %10, %12 : vector<16x256xf32>
    %c0_11 = arith.constant 0 : index
    %c0_12 = arith.constant 0 : index
    %c7 = arith.constant 7 : index
    %c0_13 = arith.constant 0 : index
    %14 = vector.load %arg4[%c0_11, %c0_12, %c7, %c0_13] : memref<1x3x8x256xf32, #tpu.memory_space<vmem>>, vector<1x1x1x256xf32>
    %15 = vector.shape_cast %14 : vector<1x1x1x256xf32> to vector<1x256xf32>
    %cst_14 = arith.constant 2.126000e-01 : f32
    %16 = vector.broadcast %cst_14 : f32 to vector<1x256xf32>
    %17 = arith.mulf %16, %15 : vector<1x256xf32>
    %c0_15 = arith.constant 0 : index
    %c1_16 = arith.constant 1 : index
    %c7_17 = arith.constant 7 : index
    %c0_18 = arith.constant 0 : index
    %18 = vector.load %arg4[%c0_15, %c1_16, %c7_17, %c0_18] : memref<1x3x8x256xf32, #tpu.memory_space<vmem>>, vector<1x1x1x256xf32>
    %19 = vector.shape_cast %18 : vector<1x1x1x256xf32> to vector<1x256xf32>
    %cst_19 = arith.constant 7.152000e-01 : f32
    %20 = vector.broadcast %cst_19 : f32 to vector<1x256xf32>
    %21 = arith.mulf %20, %19 : vector<1x256xf32>
    %22 = arith.addf %17, %21 : vector<1x256xf32>
    %c0_20 = arith.constant 0 : index
    %c2_21 = arith.constant 2 : index
    %c7_22 = arith.constant 7 : index
    %c0_23 = arith.constant 0 : index
    %23 = vector.load %arg4[%c0_20, %c2_21, %c7_22, %c0_23] : memref<1x3x8x256xf32, #tpu.memory_space<vmem>>, vector<1x1x1x256xf32>
    %24 = vector.shape_cast %23 : vector<1x1x1x256xf32> to vector<1x256xf32>
    %cst_24 = arith.constant 7.220000e-02 : f32
    %25 = vector.broadcast %cst_24 : f32 to vector<1x256xf32>
    %26 = arith.mulf %25, %24 : vector<1x256xf32>
    %27 = arith.addf %22, %26 : vector<1x256xf32>
    %c0_25 = arith.constant 0 : index
    %c0_26 = arith.constant 0 : index
    %c0_27 = arith.constant 0 : index
    %c0_28 = arith.constant 0 : index
    %28 = vector.load %arg5[%c0_25, %c0_26, %c0_27, %c0_28] : memref<1x3x8x256xf32, #tpu.memory_space<vmem>>, vector<1x1x1x256xf32>
    %29 = vector.shape_cast %28 : vector<1x1x1x256xf32> to vector<1x256xf32>
    %cst_29 = arith.constant 2.126000e-01 : f32
    %30 = vector.broadcast %cst_29 : f32 to vector<1x256xf32>
    %31 = arith.mulf %30, %29 : vector<1x256xf32>
    %c0_30 = arith.constant 0 : index
    %c1_31 = arith.constant 1 : index
    %c0_32 = arith.constant 0 : index
    %c0_33 = arith.constant 0 : index
    %32 = vector.load %arg5[%c0_30, %c1_31, %c0_32, %c0_33] : memref<1x3x8x256xf32, #tpu.memory_space<vmem>>, vector<1x1x1x256xf32>
    %33 = vector.shape_cast %32 : vector<1x1x1x256xf32> to vector<1x256xf32>
    %cst_34 = arith.constant 7.152000e-01 : f32
    %34 = vector.broadcast %cst_34 : f32 to vector<1x256xf32>
    %35 = arith.mulf %34, %33 : vector<1x256xf32>
    %36 = arith.addf %31, %35 : vector<1x256xf32>
    %c0_35 = arith.constant 0 : index
    %c2_36 = arith.constant 2 : index
    %c0_37 = arith.constant 0 : index
    %c0_38 = arith.constant 0 : index
    %37 = vector.load %arg5[%c0_35, %c2_36, %c0_37, %c0_38] : memref<1x3x8x256xf32, #tpu.memory_space<vmem>>, vector<1x1x1x256xf32>
    %38 = vector.shape_cast %37 : vector<1x1x1x256xf32> to vector<1x256xf32>
    %cst_39 = arith.constant 7.220000e-02 : f32
    %39 = vector.broadcast %cst_39 : f32 to vector<1x256xf32>
    %40 = arith.mulf %39, %38 : vector<1x256xf32>
    %41 = arith.addf %36, %40 : vector<1x256xf32>
    %c0_i32 = arith.constant 0 : i32
    %42 = arith.cmpi sgt, %arg1, %c0_i32 : i32
    %cst_40 = arith.constant 1.000000e+00 : f32
    %cst_41 = arith.constant 0.000000e+00 : f32
    %43 = arith.select %42, %cst_40, %cst_41 : f32
    %44 = vector.broadcast %43 : f32 to vector<1x256xf32>
    %45 = arith.mulf %27, %44 : vector<1x256xf32>
    %c0_i32_42 = arith.constant 0 : i32
    %46 = arith.cmpi slt, %arg1, %c0_i32_42 : i32
    %cst_43 = arith.constant 1.000000e+00 : f32
    %cst_44 = arith.constant 0.000000e+00 : f32
    %47 = arith.select %46, %cst_43, %cst_44 : f32
    %48 = vector.broadcast %47 : f32 to vector<1x256xf32>
    %49 = arith.mulf %41, %48 : vector<1x256xf32>
    %c8 = arith.constant 8 : index
    %c0_45 = arith.constant 0 : index
    %50 = vector.load %arg7[%c8, %c0_45] : memref<32x256xf32, #tpu.memory_space<vmem>>, vector<16x256xf32>
    tpu.vector_store %arg7[%c8, %c0_45], %13 {strides = array<i32>} : memref<32x256xf32, #tpu.memory_space<vmem>>, vector<16x256xf32>,
    %c7_46 = arith.constant 7 : index
    %c0_47 = arith.constant 0 : index
    %51 = vector.load %arg7[%c7_46, %c0_47] : memref<32x256xf32, #tpu.memory_space<vmem>>, vector<1x256xf32>
    tpu.vector_store %arg7[%c7_46, %c0_47], %45 {strides = array<i32>} : memref<32x256xf32, #tpu.memory_space<vmem>>, vector<1x256xf32>,
    %c24 = arith.constant 24 : index
    %c0_48 = arith.constant 0 : index
    %52 = vector.load %arg7[%c24, %c0_48] : memref<32x256xf32, #tpu.memory_space<vmem>>, vector<1x256xf32>
    tpu.vector_store %arg7[%c24, %c0_48], %49 {strides = array<i32>} : memref<32x256xf32, #tpu.memory_space<vmem>>, vector<1x256xf32>,
    %c7_49 = arith.constant 7 : index
    %c0_50 = arith.constant 0 : index
    %53 = vector.load %arg7[%c7_49, %c0_50] : memref<32x256xf32, #tpu.memory_space<vmem>>, vector<16x256xf32>
    %c9 = arith.constant 9 : index
    %c0_51 = arith.constant 0 : index
    %54 = vector.load %arg7[%c9, %c0_51] : memref<32x256xf32, #tpu.memory_space<vmem>>, vector<16x256xf32>
    %55 = tpu.iota {dimensions = array<i32: 1>} : vector<16x256xi32>
    %c0_i32_52 = arith.constant 0 : i32
    %56 = vector.broadcast %c0_i32_52 : i32 to vector<16x256xi32>
    %57 = arith.cmpi sgt, %55, %56 : vector<16x256xi32>
    %c1_i32 = arith.constant 1 : i32
    %58 = tpu.dynamic_rotate %13 by %c1_i32 dim 1 : vector<16x256xf32>, i32 -> vector<16x256xf32>
    %cst_53 = arith.constant 0.000000e+00 : f32
    %59 = vector.broadcast %cst_53 : f32 to vector<16x256xf32>
    %60 = arith.select %57, %58, %59 : vector<16x256xi1>, vector<16x256xf32>
    %c255_i32 = arith.constant 255 : i32
    %61 = vector.broadcast %c255_i32 : i32 to vector<16x256xi32>
    %62 = arith.cmpi slt, %55, %61 : vector<16x256xi32>
    %c255_i32_54 = arith.constant 255 : i32
    %63 = tpu.dynamic_rotate %13 by %c255_i32_54 dim 1 : vector<16x256xf32>, i32 -> vector<16x256xf32>
    %cst_55 = arith.constant 0.000000e+00 : f32
    %64 = vector.broadcast %cst_55 : f32 to vector<16x256xf32>
    %65 = arith.select %62, %63, %64 : vector<16x256xi1>, vector<16x256xf32>
    %66 = arith.addf %53, %54 : vector<16x256xf32>
    %67 = arith.addf %66, %60 : vector<16x256xf32>
    %68 = arith.addf %67, %65 : vector<16x256xf32>
    %cst_56 = arith.constant 4.000000e+00 : f32
    %69 = vector.broadcast %cst_56 : f32 to vector<16x256xf32>
    %70 = arith.mulf %69, %13 : vector<16x256xf32>
    %71 = arith.subf %68, %70 : vector<16x256xf32>
    %72 = math.absf %71 : vector<16x256xf32>
    %73 = arith.addf %1, %3 : vector<16x256xf32>
    %74 = arith.addf %73, %5 : vector<16x256xf32>
    %cst_57 = arith.constant 0.333333343 : f32
    %75 = vector.broadcast %cst_57 : f32 to vector<16x256xf32>
    %76 = arith.mulf %74, %75 : vector<16x256xf32>
    %77 = arith.subf %1, %76 : vector<16x256xf32>
    %78 = arith.mulf %77, %77 : vector<16x256xf32>
    %79 = arith.subf %3, %76 : vector<16x256xf32>
    %80 = arith.mulf %79, %79 : vector<16x256xf32>
    %81 = arith.addf %78, %80 : vector<16x256xf32>
    %82 = arith.subf %5, %76 : vector<16x256xf32>
    %83 = arith.mulf %82, %82 : vector<16x256xf32>
    %84 = arith.addf %81, %83 : vector<16x256xf32>
    %cst_58 = arith.constant 0.333333343 : f32
    %85 = vector.broadcast %cst_58 : f32 to vector<16x256xf32>
    %86 = arith.mulf %84, %85 : vector<16x256xf32>
    %87 = math.sqrt %86 : vector<16x256xf32>
    %c0_59 = arith.constant 0 : index
    %88 = memref.load %arg2[%c0_59] : memref<1xf32, #tpu.memory_space<smem>>
    %89 = vector.broadcast %88 : f32 to vector<16x256xf32>
    %90 = arith.subf %13, %89 : vector<16x256xf32>
    %91 = arith.mulf %90, %90 : vector<16x256xf32>
    %cst_60 = arith.constant 0.000000e+00 : f32
    %92 = vector.broadcast %cst_60 : f32 to vector<16x256xf32>
    %93 = arith.subf %92, %91 : vector<16x256xf32>
    %cst_61 = arith.constant 1.250000e+01 : f32
    %94 = vector.broadcast %cst_61 : f32 to vector<16x256xf32>
    %95 = arith.mulf %93, %94 : vector<16x256xf32>
    %96 = math.exp %95 : vector<16x256xf32>
    %97 = arith.mulf %72, %87 : vector<16x256xf32>
    %98 = arith.mulf %97, %96 : vector<16x256xf32>
    %c0_62 = arith.constant 0 : index
    %c0_63 = arith.constant 0 : index
    %c0_64 = arith.constant 0 : index
    %c0_65 = arith.constant 0 : index
    %99 = vector.load %arg6[%c0_62, %c0_63, %c0_64, %c0_65] : memref<1x1x16x256xf32, #tpu.memory_space<vmem>>, vector<1x1x16x256xf32>
    %100 = vector.shape_cast %99 : vector<1x1x16x256xf32> to vector<16x256xf32>
    %101 = vector.shape_cast %98 : vector<16x256xf32> to vector<1x1x16x256xf32>
    tpu.vector_store %arg6[%c0_62, %c0_63, %c0_64, %c0_65], %101 {strides = array<i32>} : memref<1x1x16x256xf32, #tpu.memory_space<vmem>>, vector<1x1x16x256xf32>,
    return
  }
  func.func @transform_0(%arg0: i32, %arg1: i32) -> i32 {
    %c0_i32 = arith.constant 0 : i32
    %c0_i32_0 = arith.constant 0 : i32
    return %c0_i32 : i32
  }
  func.func @transform_1(%arg0: i32, %arg1: i32) -> (i32, i32, i32, i32) {
    %c0_i32 = arith.constant 0 : i32
    %c0_i32_0 = arith.constant 0 : i32
    %c0_i32_1 = arith.constant 0 : i32
    return %arg0, %c0_i32, %arg1, %c0_i32_0 : i32, i32, i32, i32
  }
  func.func @transform_2(%arg0: i32, %arg1: i32) -> (i32, i32, i32, i32) {
    %c2_i32 = arith.constant 2 : i32
    %0 = arith.muli %arg1, %c2_i32 : i32
    %c1_i32 = arith.constant 1 : i32
    %1 = arith.subi %0, %c1_i32 : i32
    %c0_i32 = arith.constant 0 : i32
    %2 = arith.maxsi %1, %c0_i32 : i32
    %c0_i32_0 = arith.constant 0 : i32
    %c0_i32_1 = arith.constant 0 : i32
    %c0_i32_2 = arith.constant 0 : i32
    return %arg0, %c0_i32_0, %2, %c0_i32_1 : i32, i32, i32, i32
  }
  func.func @transform_3(%arg0: i32, %arg1: i32) -> (i32, i32, i32, i32) {
    %c1_i32 = arith.constant 1 : i32
    %0 = arith.addi %arg1, %c1_i32 : i32
    %c2_i32 = arith.constant 2 : i32
    %1 = arith.muli %0, %c2_i32 : i32
    %c1_i32_0 = arith.constant 1 : i32
    %2 = arith.minsi %1, %c1_i32_0 : i32
    %c0_i32 = arith.constant 0 : i32
    %c0_i32_1 = arith.constant 0 : i32
    %c0_i32_2 = arith.constant 0 : i32
    return %arg0, %c0_i32, %2, %c0_i32_1 : i32, i32, i32, i32
  }
  func.func @transform_4(%arg0: i32, %arg1: i32) -> (i32, i32, i32, i32) {
    %c0_i32 = arith.constant 0 : i32
    %c0_i32_0 = arith.constant 0 : i32
    %c0_i32_1 = arith.constant 0 : i32
    return %arg0, %c0_i32, %arg1, %c0_i32_0 : i32, i32, i32, i32
  }
}

</mosaic_0001>

<llo_original>
// kernel: tpu_custom_call.1
$region0: #{tpu_custom_call.1}
  #allocation0 [shape = 'u32[]', space=smem, size = 0x4, offset = 0x4, fixed_abs, tag = 'smem constant byte address 0x4 - core index']
  #allocation1 [shape = 'u32[72,128]{1,0:T(1,128)}', space=vmem, size = 0x9000, scoped, tag = 'internal scratch']
  #allocation2 [shape = 'f32[32,256]{1,0:T(8,128)}', space=vmem, size = 0x8000, scoped, tag = 'scratch operand']
  #allocation3 [shape = 'f32[1]{0:T(128)S(6)}', space=smem, size = 0x200, scoped, tag = 'scoped memory for tpu_custom_call.1']
  %s0 = inlined_call_operand.<no memory space> [shape: f32[1], index: 0, kind: input, shape index: {}]
  %s1 = inlined_call_operand.hbm [shape: f32[2,3,16,256], index: 1, kind: input, shape index: {}]
  %s2 = inlined_call_operand.hbm [shape: f32[2,3,16,256], index: 2, kind: input, shape index: {}]
  %s3 = inlined_call_operand.hbm [shape: f32[2,3,16,256], index: 3, kind: input, shape index: {}]
  %s4 = inlined_call_operand.hbm [shape: f32[2,1,16,256], index: 4, kind: output, shape index: {}]
  %s5 = sld [smem:[#allocation0]]
  $region61: #{tpu_custom_call.1} parent=0
    _
  %s7 = ssub.s32 1, %s5
  %s8 = scalar_select 0, %s7, %s5
  %9 = sst [smem:[#allocation3]] %s0
  $region1: #{tpu_custom_call.1} parent=0
    #allocation4 [shape = 'u8[98304]{0}', space=vmem, size = 0x18000, scoped, tag = 'input window, operand 1']
    #allocation5 [shape = 's32[2]{0}', space=sflag, size = 0x8, scoped, tag = 'scoped memory for tpu_custom_call.1']
    #allocation6 [shape = 's32[2]{0}', space=sflag, size = 0x8, scoped, tag = 'scoped memory for tpu_custom_call.1']
    #allocation7 [shape = 'u8[49152]{0}', space=vmem, size = 0xc000, scoped, tag = 'input window, operand 2']
    #allocation8 [shape = 's32[2]{0}', space=sflag, size = 0x8, scoped, tag = 'scoped memory for tpu_custom_call.1']
    #allocation9 [shape = 'u8[49152]{0}', space=vmem, size = 0xc000, scoped, tag = 'input window, operand 3']
    #allocation10 [shape = 'u8[32768]{0}', space=vmem, size = 0x8000, scoped, tag = 'output window, operand 0']
    %10 = vsyncpa [#allocation5], 0
    %s11 = scalar_lea.sflag [#allocation5], 1
    %12 = vsyncpa %s11, 0
    %13 = vsyncpa [#allocation8], 0
    %s14 = scalar_lea.sflag [#allocation8], 1
    %15 = vsyncpa %s14, 0
    %16 = vsyncpa [#allocation6], 0
    %s17 = scalar_lea.sflag [#allocation6], 1
    %18 = vsyncpa %s17, 0
    loop: start=0, step=1, limit=4
    $region2: #{tpu_custom_call.1} parent=1 // loop_pre_header
      _
    $region3: #{tpu_custom_call.1} parent=1 // loop_header
      %s20 = sphi 0, %s24
      %p21 = scmp.ge.s32.totalorder %s20, 4
      %s27 = sphi 0, %s39
      %s28 = sphi 0, %s35
      %s29 = sphi 0, %s27
      %s30 = sphi 0, %s28
      %s31 = sphi 0, %s29
      %s32 = sphi 0, %s30
      %s40 = sphi 0, %s40
      %s42 = sphi 0, %s40
      %s43 = sphi 0, %s42
      %s57 = sphi 0, %s43
      %s65 = sphi 0, %s67
      %s68 = sphi 0, %s65
      %s69 = sphi 0, %s68
      %s85 = sphi 0, %s69
      %s101 = sphi 0, %s103
      %s104 = sphi 0, %s101
      %s105 = sphi 0, %s104
      %s121 = sphi 0, %s105
      %s137 = sphi 0, %s139
      %s140 = sphi 0, %s137
      %s141 = sphi 0, %s140
      %s157 = sphi 0, %s141
      %s165 = sphi 0, %s167
      %s168 = sphi 0, %s165
      %s169 = sphi 0, %s168
      %s185 = sphi 0, %s169
    $region4: #{tpu_custom_call.1} parent=1 // loop_header_branch
      %23 = sbr.rel (%p21) target = $region8
    $region5: #{tpu_custom_call.1} parent=1 // loop_body
      %s25 = ssub.s32 %s20, 1
      %s26 = ssub.s32 %s20, 2
      %s33 = sadd.s32 1, %s28
      %p34 = scmp.ge.s32.totalorder %s33, 1
      %s35 = scalar_select %p34, 0, %s33
      %s36 = sadd.s32 1, %s27
      %s37 = scalar_select %p34, %s36, %s27
      %p38 = scmp.ge.s32.totalorder %s37, 2
      %s39 = scalar_select %p38, 0, %s37
      %s41 = sadd.s32 %s40, 1
      %p44 = scmp.eq.s32.totalorder %s20, 1
      %p45 = scmp.ne.s32.totalorder %s40, %s42
      %p46 = scmp.eq.s32.totalorder %s20, 0
      %p47 = por %p45, %p46
      %p48 = scmp.ne.s32.totalorder %s40, %s42
      %p49 = scmp.eq.s32.totalorder %s25, 1
      %p50 = por %p48, %p49
      %p51 = scmp.ne.s32.totalorder %s42, %s43
      %p52 = scmp.eq.s32.totalorder %s25, 0
      %p53 = por %p51, %p52
      %p54 = scmp.ne.s32.totalorder %s42, %s43
      %p55 = scmp.eq.s32.totalorder %s26, 1
      %p56 = por %p54, %p55
      %p58 = scmp.ne.s32.totalorder %s43, %s57
      %p59 = scmp.eq.s32.totalorder %s26, 0
      %p60 = por %p58, %p59
      %s61 = ssub.s32 %s27, %s39
      %s62 = ssub.s32 %s28, %s35
      %s63 = sor.u32 %s61, %s62
      %p64 = scmp.eq.s32.totalorder %s63, 0
      %s66 = sadd.s32 %s65, 1
      %s67 = scalar_select %p64, %s65, %s66
      %p70 = pneg %p64
      %p71 = scmp.eq.s32.totalorder %s20, 1
      %p72 = por %p70, %p71
      %p73 = scmp.ne.s32.totalorder %s65, %s68
      %p74 = scmp.eq.s32.totalorder %s20, 0
      %p75 = por %p73, %p74
      %p76 = scmp.ne.s32.totalorder %s65, %s68
      %p77 = scmp.eq.s32.totalorder %s25, 1
      %p78 = por %p76, %p77
      %p79 = scmp.ne.s32.totalorder %s68, %s69
      %p80 = scmp.eq.s32.totalorder %s25, 0
      %p81 = por %p79, %p80
      %p82 = scmp.ne.s32.totalorder %s68, %s69
      %p83 = scmp.eq.s32.totalorder %s26, 1
      %p84 = por %p82, %p83
      %p86 = scmp.ne.s32.totalorder %s69, %s85
      %p87 = scmp.eq.s32.totalorder %s26, 0
      %p88 = por %p86, %p87
      %s89 = smul.u32 %s28, 2
      %s90 = ssub.s32 %s89, 1
      %p91 = scmp.gt.s32.totalorder %s90, 0
      %s92 = scalar_select %p91, %s90, 0
      %s93 = smul.u32 %s35, 2
      %s94 = ssub.s32 %s93, 1
      %p95 = scmp.gt.s32.totalorder %s94, 0
      %s96 = scalar_select %p95, %s94, 0
      %s97 = ssub.s32 %s27, %s39
      %s98 = ssub.s32 %s92, %s96
      %s99 = sor.u32 %s97, %s98
      %p100 = scmp.eq.s32.totalorder %s99, 0
      %s102 = sadd.s32 %s101, 1
      %s103 = scalar_select %p100, %s101, %s102
      %p106 = pneg %p100
      %p107 = scmp.eq.s32.totalorder %s20, 1
      %p108 = por %p106, %p107
      %p109 = scmp.ne.s32.totalorder %s101, %s104
      %p110 = scmp.eq.s32.totalorder %s20, 0
      %p111 = por %p109, %p110
      %p112 = scmp.ne.s32.totalorder %s101, %s104
      %p113 = scmp.eq.s32.totalorder %s25, 1
      %p114 = por %p112, %p113
      %p115 = scmp.ne.s32.totalorder %s104, %s105
      %p116 = scmp.eq.s32.totalorder %s25, 0
      %p117 = por %p115, %p116
      %p118 = scmp.ne.s32.totalorder %s104, %s105
      %p119 = scmp.eq.s32.totalorder %s26, 1
      %p120 = por %p118, %p119
      %p122 = scmp.ne.s32.totalorder %s105, %s121
      %p123 = scmp.eq.s32.totalorder %s26, 0
      %p124 = por %p122, %p123
      %s125 = sadd.s32 %s28, 1
      %s126 = smul.u32 %s125, 2
      %p127 = scmp.lt.s32.totalorder %s126, 1
      %s128 = scalar_select %p127, %s126, 1
      %s129 = sadd.s32 %s35, 1
      %s130 = smul.u32 %s129, 2
      %p131 = scmp.lt.s32.totalorder %s130, 1
      %s132 = scalar_select %p131, %s130, 1
      %s133 = ssub.s32 %s27, %s39
      %s134 = ssub.s32 %s128, %s132
      %s135 = sor.u32 %s133, %s134
      %p136 = scmp.eq.s32.totalorder %s135, 0
      %s138 = sadd.s32 %s137, 1
      %s139 = scalar_select %p136, %s137, %s138
      %p142 = pneg %p136
      %p143 = scmp.eq.s32.totalorder %s20, 1
      %p144 = por %p142, %p143
      %p145 = scmp.ne.s32.totalorder %s137, %s140
      %p146 = scmp.eq.s32.totalorder %s20, 0
      %p147 = por %p145, %p146
      %p148 = scmp.ne.s32.totalorder %s137, %s140
      %p149 = scmp.eq.s32.totalorder %s25, 1
      %p150 = por %p148, %p149
      %p151 = scmp.ne.s32.totalorder %s140, %s141
      %p152 = scmp.eq.s32.totalorder %s25, 0
      %p153 = por %p151, %p152
      %p154 = scmp.ne.s32.totalorder %s140, %s141
      %p155 = scmp.eq.s32.totalorder %s26, 1
      %p156 = por %p154, %p155
      %p158 = scmp.ne.s32.totalorder %s141, %s157
      %p159 = scmp.eq.s32.totalorder %s26, 0
      %p160 = por %p158, %p159
      %s161 = ssub.s32 %s27, %s39
      %s162 = ssub.s32 %s28, %s35
      %s163 = sor.u32 %s161, %s162
      %p164 = scmp.eq.s32.totalorder %s163, 0
      %s166 = sadd.s32 %s165, 1
      %s167 = scalar_select %p164, %s165, %s166
      %p170 = pneg %p164
      %p171 = scmp.eq.s32.totalorder %s20, 1
      %p172 = por %p170, %p171
      %p173 = scmp.ne.s32.totalorder %s165, %s168
      %p174 = scmp.eq.s32.totalorder %s20, 0
      %p175 = por %p173, %p174
      %p176 = scmp.ne.s32.totalorder %s165, %s168
      %p177 = scmp.eq.s32.totalorder %s25, 1
      %p178 = por %p176, %p177
      %p179 = scmp.ne.s32.totalorder %s168, %s169
      %p180 = scmp.eq.s32.totalorder %s25, 0
      %p181 = por %p179, %p180
      %p182 = scmp.ne.s32.totalorder %s168, %s169
      %p183 = scmp.eq.s32.totalorder %s26, 1
      %p184 = por %p182, %p183
      %p186 = scmp.ne.s32.totalorder %s169, %s185
      %p187 = scmp.eq.s32.totalorder %s26, 0
      %p188 = por %p186, %p187
      %p189 = scmp.le.s32.totalorder 1, %s20
      %p190 = scmp.lt.s32.totalorder %s20, 3
      %p191 = pnand %p189, %p190
      %p192 = pneg %p191
      // Predicated region
      $region9: #{tpu_custom_call.1} parent=5 // pred_check
        _
      $region10: #{tpu_custom_call.1} parent=5 // pred_check_branch
        %194 = sbr.rel (%p191) target = $region12
      $region11: #{tpu_custom_call.1} parent=5 // pred_region
        %s195 = ssub.s32 %s20, 1
        // Predicated region
        $region13: #{tpu_custom_call.1} parent=11 // pred_check
          %p196 = pneg %p53
        $region14: #{tpu_custom_call.1} parent=11 // pred_check_branch
          %198 = sbr.rel (%p196) target = $region16
        $region15: #{tpu_custom_call.1} parent=11 // pred_region
          _
        $region16: #{tpu_custom_call.1} parent=11 // pred_fallthru
          _
      $region12: #{tpu_custom_call.1} parent=5 // pred_fallthru
        _
      %p199 = scmp.lt.s32.totalorder %s20, 2
      // Predicated region
      $region17: #{tpu_custom_call.1} parent=5 // pred_check
        %p200 = pneg %p199
      $region18: #{tpu_custom_call.1} parent=5 // pred_check_branch
        %202 = sbr.rel (%p200) target = $region20
      $region19: #{tpu_custom_call.1} parent=5 // pred_region
        // Predicated region
        $region21: #{tpu_custom_call.1} parent=19 // pred_check
          %p203 = pneg %p75
        $region22: #{tpu_custom_call.1} parent=19 // pred_check_branch
          %205 = sbr.rel (%p203) target = $region24
        $region23: #{tpu_custom_call.1} parent=19 // pred_region
          %s206 = sand.u32 %s65, 1
          %s207 = scalar_lea.sflag [#allocation5], %s206
          %s208 = sand.u32 %s65, 1
          %s209 = smul.addr %s208, 96
          %s210 = scalar_lea.vmem [#allocation4], %s209
          %s211 = smul.u32 2, %s28
          %213 = vsyncadd %s207, 0
          %s214 = smul.addr %s211, 2
          %s215 = smul.addr %s27, 12
          %s216 = sadd.s32 %s214, %s215
          %s217 = smul.addr %s216, 8
          %s218 = scalar_lea.hbm %s1, %s217
          %s219 = sshll.u32 %s218, 4
          %s220 = int_to_ptr.hbm [resolvable:$true] %s219
          %s221 = sshll.u32 %s210, 4
          %s222 = int_to_ptr.vmem [resolvable:$true] %s221
          %227 = dma.hbm_to_vmem [thread:$0]  %s220, 1536, %s222, %s207, 256, 256, 16
        $region24: #{tpu_custom_call.1} parent=19 // pred_fallthru
          _
        // Predicated region
        $region25: #{tpu_custom_call.1} parent=19 // pred_check
          %p228 = pneg %p111
        $region26: #{tpu_custom_call.1} parent=19 // pred_check_branch
          %230 = sbr.rel (%p228) target = $region28
        $region27: #{tpu_custom_call.1} parent=19 // pred_region
          %s231 = sand.u32 %s20, 1
          %s232 = scalar_lea.sflag [#allocation8], %s231
          %s233 = sand.u32 %s101, 1
          %s234 = smul.addr %s233, 48
          %s235 = scalar_lea.vmem [#allocation7], %s234
          %s236 = smul.u32 %s28, 2
          %s237 = ssub.s32 %s236, 1
          %p238 = scmp.gt.s32.totalorder %s237, 0
          %s239 = scalar_select %p238, %s237, 0
          %241 = vsyncadd %s232, 0
          %s242 = smul.addr %s239, 2
          %s243 = smul.addr %s27, 12
          %s244 = sadd.s32 %s242, %s243
          %s245 = smul.addr %s244, 8
          %s246 = scalar_lea.hbm %s2, %s245
          %s247 = sshll.u32 %s246, 4
          %s248 = int_to_ptr.hbm [resolvable:$true] %s247
          %s249 = sshll.u32 %s235, 4
          %s250 = int_to_ptr.vmem [resolvable:$true] %s249
          %255 = dma.hbm_to_vmem [thread:$0]  %s248, 768, %s250, %s232, 512, 256, 16
        $region28: #{tpu_custom_call.1} parent=19 // pred_fallthru
          _
        // Predicated region
        $region29: #{tpu_custom_call.1} parent=19 // pred_check
          %p256 = pneg %p147
        $region30: #{tpu_custom_call.1} parent=19 // pred_check_branch
          %258 = sbr.rel (%p256) target = $region32
        $region31: #{tpu_custom_call.1} parent=19 // pred_region
          %s259 = sand.u32 %s20, 1
          %s260 = scalar_lea.sflag [#allocation8], %s259
          %s261 = sand.u32 %s137, 1
          %s262 = smul.addr %s261, 48
          %s263 = scalar_lea.vmem [#allocation9], %s262
          %s264 = sadd.s32 %s28, 1
          %s265 = smul.u32 %s264, 2
          %p266 = scmp.lt.s32.totalorder %s265, 1
          %s267 = scalar_select %p266, %s265, 1
          %269 = vsyncadd %s260, 0
          %s270 = smul.addr %s267, 2
          %s271 = smul.addr %s27, 12
          %s272 = sadd.s32 %s270, %s271
          %s273 = smul.addr %s272, 8
          %s274 = scalar_lea.hbm %s3, %s273
          %s275 = sshll.u32 %s274, 4
          %s276 = int_to_ptr.hbm [resolvable:$true] %s275
          %s277 = sshll.u32 %s263, 4
          %s278 = int_to_ptr.vmem [resolvable:$true] %s277
          %283 = dma.hbm_to_vmem [thread:$0]  %s276, 768, %s278, %s260, 512, 256, 16
        $region32: #{tpu_custom_call.1} parent=19 // pred_fallthru
          _
      $region20: #{tpu_custom_call.1} parent=5 // pred_fallthru
        _
      %p284 = scmp.le.s32.totalorder 1, %s20
      %p285 = scmp.lt.s32.totalorder %s20, 3
      %p286 = pnand %p284, %p285
      %p287 = pneg %p286
      // Predicated region
      $region33: #{tpu_custom_call.1} parent=5 // pred_check
        _
      $region34: #{tpu_custom_call.1} parent=5 // pred_check_branch
        %289 = sbr.rel (%p286) target = $region36
      $region35: #{tpu_custom_call.1} parent=5 // pred_region
        %s290 = ssub.s32 %s20, 1
        %s291 = sand.u32 %s68, 1
        %s292 = scalar_lea.sflag [#allocation5], %s291
        %s293 = sand.u32 %s68, 1
        %s294 = smul.addr %s293, 96
        %s295 = scalar_lea.vmem [#allocation4], %s294
        // Predicated region
        $region37: #{tpu_custom_call.1} parent=35 // pred_check
          %p296 = pneg %p81
        $region38: #{tpu_custom_call.1} parent=35 // pred_check_branch
          %298 = sbr.rel (%p296) target = $region40
        $region39: #{tpu_custom_call.1} parent=35 // pred_region
          %300 = dma.done %s292, 1536
        $region40: #{tpu_custom_call.1} parent=35 // pred_fallthru
          _
        %s301 = sand.u32 %s25, 1
        %s302 = scalar_lea.sflag [#allocation8], %s301
        %s303 = sand.u32 %s104, 1
        %s304 = smul.addr %s303, 48
        %s305 = scalar_lea.vmem [#allocation7], %s304
        // Predicated region
        $region41: #{tpu_custom_call.1} parent=35 // pred_check
          %p306 = pneg %p117
        $region42: #{tpu_custom_call.1} parent=35 // pred_check_branch
          %308 = sbr.rel (%p306) target = $region44
        $region43: #{tpu_custom_call.1} parent=35 // pred_region
          %310 = dma.done %s302, 768
        $region44: #{tpu_custom_call.1} parent=35 // pred_fallthru
          _
        %s311 = sand.u32 %s25, 1
        %s312 = scalar_lea.sflag [#allocation8], %s311
        %s313 = sand.u32 %s140, 1
        %s314 = smul.addr %s313, 48
        %s315 = scalar_lea.vmem [#allocation9], %s314
        // Predicated region
        $region45: #{tpu_custom_call.1} parent=35 // pred_check
          %p316 = pneg %p153
        $region46: #{tpu_custom_call.1} parent=35 // pred_check_branch
          %318 = sbr.rel (%p316) target = $region48
        $region47: #{tpu_custom_call.1} parent=35 // pred_region
          %320 = dma.done %s312, 768
        $region48: #{tpu_custom_call.1} parent=35 // pred_fallthru
          _
        %p321 = pneg %p53
        %p322 = pneg %p50
        %s323 = sand.u32 %s68, 1
        %s324 = scalar_lea.sflag [#allocation5], %s323
        %s325 = sand.u32 %s68, 1
        %s326 = smul.addr %s325, 96
        %s327 = scalar_lea.vmem [#allocation4], %s326
        %p328 = pneg %p81
        %p329 = pneg %p78
        %s330 = sand.u32 %s25, 1
        %s331 = scalar_lea.sflag [#allocation8], %s330
        %s332 = sand.u32 %s104, 1
        %s333 = smul.addr %s332, 48
        %s334 = scalar_lea.vmem [#allocation7], %s333
        %p335 = pneg %p117
        %p336 = pneg %p114
        %s337 = sand.u32 %s25, 1
        %s338 = scalar_lea.sflag [#allocation8], %s337
        %s339 = sand.u32 %s140, 1
        %s340 = smul.addr %s339, 48
        %s341 = scalar_lea.vmem [#allocation9], %s340
        %p342 = pneg %p153
        %p343 = pneg %p150
        %p344 = pneg %p181
        %p345 = pneg %p178
        %s346 = sand.u32 %s168, 1
        %s347 = scalar_lea.sflag [#allocation6], %s346
        %s348 = sand.u32 %s168, 1
        %s349 = smul.addr %s348, 32
        %s350 = scalar_lea.vmem [#allocation10], %s349
        %s351 = smul.u32 2, %s30
        %s352 = smul.u32 %s30, 2
        %s353 = ssub.s32 %s352, 1
        %p354 = scmp.gt.s32.totalorder %s353, 0
        %s355 = scalar_select %p354, %s353, 0
        %s356 = sadd.s32 %s30, 1
        %s357 = smul.u32 %s356, 2
        %p358 = scmp.lt.s32.totalorder %s357, 1
        %s359 = scalar_select %p358, %s357, 1
        %s360 = smul.u32 2, %s30
        %v361 = vld [vmem:[%s295] sm:$0xff]
        %v362 = vld [vmem:[%s295 + $0x8] sm:$0xff]
        %v363 = vld [vmem:[%s295 + $0x10] sm:$0xff]
        %v364 = vld [vmem:[%s295 + $0x18] sm:$0xff]
        %s365 = scalar_lea.vmem %s295, 32 [#allocation4]
        %v366 = vld [vmem:[%s365] sm:$0xff]
        %v367 = vld [vmem:[%s365 + $0x8] sm:$0xff]
        %v368 = vld [vmem:[%s365 + $0x10] sm:$0xff]
        %v369 = vld [vmem:[%s365 + $0x18] sm:$0xff]
        %s370 = scalar_lea.vmem %s295, 64 [#allocation4]
        %v371 = vld [vmem:[%s370] sm:$0xff]
        %v372 = vld [vmem:[%s370 + $0x8] sm:$0xff]
        %v373 = vld [vmem:[%s370 + $0x10] sm:$0xff]
        %v374 = vld [vmem:[%s370 + $0x18] sm:$0xff]
        %v375 = vmul.f32 %v361, 0.2126
        %v376 = vmul.f32 %v362, 0.2126
        %v377 = vmul.f32 %v363, 0.2126
        %v378 = vmul.f32 %v364, 0.2126
        %v379 = vmul.f32 %v366, 0.7152
        %v380 = vmul.f32 %v367, 0.7152
        %v381 = vmul.f32 %v368, 0.7152
        %v382 = vmul.f32 %v369, 0.7152
        %v383 = vadd.f32 %v375, %v379
        %v384 = vadd.f32 %v376, %v380
        %v385 = vadd.f32 %v377, %v381
        %v386 = vadd.f32 %v378, %v382
        %v387 = vmul.f32 %v371, 0.0722
        %v388 = vmul.f32 %v372, 0.0722
        %v389 = vmul.f32 %v373, 0.0722
        %v390 = vmul.f32 %v374, 0.0722
        %v391 = vadd.f32 %v383, %v387
        %v392 = vadd.f32 %v384, %v388
        %v393 = vadd.f32 %v385, %v389
        %v394 = vadd.f32 %v386, %v390
        %s395 = scalar_lea.vmem %s305, 7 [#allocation7]
        %v396 = vld [vmem:[%s395] ss:$8 sm:$0x3]
        %v397 = vmul.f32 %v396, 0.2126
        %s398 = scalar_lea.vmem %s305, 16 [#allocation7]
        %s399 = scalar_lea.vmem %s398, 7 [#allocation7]
        %v400 = vld [vmem:[%s399] ss:$8 sm:$0x3]
        %v401 = vmul.f32 %v400, 0.7152
        %v402 = vadd.f32 %v397, %v401
        %s403 = scalar_lea.vmem %s305, 32 [#allocation7]
        %s404 = scalar_lea.vmem %s403, 7 [#allocation7]
        %v405 = vld [vmem:[%s404] ss:$8 sm:$0x3]
        %v406 = vmul.f32 %v405, 0.0722
        %v407 = vadd.f32 %v402, %v406
        %v408 = vld [vmem:[%s315] ss:$8 sm:$0x3]
        %v409 = vmul.f32 %v408, 0.2126
        %s410 = scalar_lea.vmem %s315, 16 [#allocation9]
        %v411 = vld [vmem:[%s410] ss:$8 sm:$0x3]
        %v412 = vmul.f32 %v411, 0.7152
        %v413 = vadd.f32 %v409, %v412
        %s414 = scalar_lea.vmem %s315, 32 [#allocation9]
        %v415 = vld [vmem:[%s414] ss:$8 sm:$0x3]
        %v416 = vmul.f32 %v415, 0.0722
        %v417 = vadd.f32 %v413, %v416
        %p418 = scmp.gt.s32.totalorder %s30, 0
        %s419 = scalar_select %p418, 1.0, 0.0
        %v420 = vstv %s419
        %v421 = vmul.f32 %v407, %v420
        %p422 = scmp.lt.s32.totalorder %s30, 0
        %s423 = scalar_select %p422, 1.0, 0.0
        %v424 = vstv %s423
        %v425 = vmul.f32 %v417, %v424
        %426 = vst [vmem:[#allocation2 + $0x10] sm:$0xff] %v391
        %427 = vst [vmem:[#allocation2 + $0x18] sm:$0xff] %v392
        %428 = vst [vmem:[#allocation2 + $0x20] sm:$0xff] %v393
        %429 = vst [vmem:[#allocation2 + $0x28] sm:$0xff] %v394
        %v430 = vlaneseq
        %vm431 = vcmp.ge.s32.totalorder %v430, 0
        %vm432 = vcmp.lt.s32.totalorder %v430, 256
        %vm433 = vmand %vm431, %vm432
        %s434 = scalar_lea.vmem [#allocation2], 7
        %435 = vst.msk [vmem:[%s434] ss:$8 sm:$0x3] %vm433, %v421
        %436 = vst.msk [vmem:[%s434] ss:$8 sm:$0x0] %vm433, %v421
        %s437 = scalar_lea.vmem [#allocation2], 48
        %438 = vst.msk [vmem:[%s437] ss:$8 sm:$0x3] %vm433, %v425
        %439 = vst.msk [vmem:[%s437] ss:$8 sm:$0x0] %vm433, %v425
        %v440 = vld [vmem:[#allocation2] sm:$0x80]
        %v441 = vld [vmem:[#allocation2 + $0x8] sm:$0x80]
        %v442 = vld [vmem:[#allocation2 + $0x10] sm:$0xff]
        %v443 = vld [vmem:[#allocation2 + $0x18] sm:$0xff]
        %v444 = vld [vmem:[#allocation2 + $0x20] sm:$0x7f]
        %v445 = vld [vmem:[#allocation2 + $0x28] sm:$0x7f]
        %v446 = vld [vmem:[#allocation2 + $0x10] sm:$0xfe]
        %v447 = vld [vmem:[#allocation2 + $0x18] sm:$0xfe]
        %v448 = vld [vmem:[#allocation2 + $0x20] sm:$0xff]
        %v449 = vld [vmem:[#allocation2 + $0x28] sm:$0xff]
        %v450 = vld [vmem:[#allocation2 + $0x30] sm:$0x1]
        %v451 = vld [vmem:[#allocation2 + $0x38] sm:$0x1]
        %v452 = vlaneseq
        %v453 = vand.u32 %v452, 127
        %v454 = vadd.s32 %v453, 128
        %vm455 = vcmp.gt.s32.totalorder %v453, 0
        %vm456 = vcmp.gt.s32.totalorder %v454, 0
        %457 = vrot.lane.b32.xlu0 %v391, 1
        %v458 = vpop.permute.xlu0 %457
        %459 = vrot.lane.b32.xlu0 %v393, 1
        %v460 = vpop.permute.xlu0 %459
        %461 = vrot.lane.b32.xlu0 %v392, 1
        %v462 = vpop.permute.xlu0 %461
        %463 = vrot.lane.b32.xlu0 %v394, 1
        %v464 = vpop.permute.xlu0 %463
        %vm465 = vcmp.lt.s32.totalorder %v453, 1
        %v466 = vsel %vm465, %v458, %v462
        %v467 = vsel %vm465, %v460, %v464
        %v468 = vsel %vm465, %v462, %v458
        %v469 = vsel %vm465, %v464, %v460
        %v470 = vsel %vm455, %v468, 0.0
        %v471 = vsel %vm456, %v466, 0.0
        %v472 = vsel %vm455, %v469, 0.0
        %v473 = vsel %vm456, %v467, 0.0
        %vm474 = vcmp.lt.s32.totalorder %v453, 255
        %vm475 = vcmp.lt.s32.totalorder %v454, 255
        %476 = vrot.lane.b32.xlu0 %v391, 127
        %v477 = vpop.permute.xlu0 %476
        %478 = vrot.lane.b32.xlu0 %v393, 127
        %v479 = vpop.permute.xlu0 %478
        %480 = vrot.lane.b32.xlu0 %v392, 127
        %v481 = vpop.permute.xlu0 %480
        %482 = vrot.lane.b32.xlu0 %v394, 127
        %v483 = vpop.permute.xlu0 %482
        %vm484 = vcmp.lt.s32.totalorder %v453, 127
        %v485 = vsel %vm484, %v477, %v481
        %v486 = vsel %vm484, %v479, %v483
        %v487 = vsel %vm484, %v481, %v477
        %v488 = vsel %vm484, %v483, %v479
        %v489 = vsel %vm474, %v485, 0.0
        %v490 = vsel %vm475, %v487, 0.0
        %v491 = vsel %vm474, %v486, 0.0
        %v492 = vsel %vm475, %v488, 0.0
        %vm499 = vcmask 1045504
        %v500 = vrot.slane %v446, 2
        %v501 = vrot.slane %v447, 2
        %v502 = vrot.slane %v448, 2
        %v503 = vsel %vm499, %v500, %v502
        %v504 = vrot.slane %v449, 2
        %v505 = vsel %vm499, %v501, %v504
        %v506 = vrot.slane %v450, 2
        %v507 = vsel %vm499, %v502, %v506
        %v508 = vrot.slane %v451, 2
        %v509 = vsel %vm499, %v504, %v508
        %v516 = vadd.f32 %v440, %v500
        %v517 = vadd.f32 %v441, %v501
        %v518 = vadd.f32 %v442, %v503
        %v519 = vadd.f32 %v443, %v505
        %v520 = vadd.f32 %v444, %v507
        %v521 = vadd.f32 %v445, %v509
        %vm526 = vcmask 1046528
        %v527 = vrot.slane %v470, 1
        %v528 = vrot.slane %v471, 1
        %v529 = vrot.slane %v472, 1
        %v530 = vsel %vm526, %v527, %v529
        %v531 = vrot.slane %v473, 1
        %v532 = vsel %vm526, %v528, %v531
        %v539 = vadd.f32 %v516, %v527
        %v540 = vadd.f32 %v517, %v528
        %v541 = vadd.f32 %v518, %v530
        %v542 = vadd.f32 %v519, %v532
        %v543 = vadd.f32 %v520, %v529
        %v544 = vadd.f32 %v521, %v531
        %v549 = vrot.slane %v489, 1
        %v550 = vrot.slane %v490, 1
        %v551 = vrot.slane %v491, 1
        %v552 = vsel %vm526, %v549, %v551
        %v553 = vrot.slane %v492, 1
        %v554 = vsel %vm526, %v550, %v553
        %v561 = vadd.f32 %v539, %v549
        %v562 = vadd.f32 %v540, %v550
        %v563 = vadd.f32 %v541, %v552
        %v564 = vadd.f32 %v542, %v554
        %v565 = vadd.f32 %v543, %v551
        %v566 = vadd.f32 %v544, %v553
        %v567 = vmul.f32 %v391, 4.0
        %v568 = vmul.f32 %v392, 4.0
        %v569 = vmul.f32 %v393, 4.0
        %v570 = vmul.f32 %v394, 4.0
        %v575 = vrot.slane %v567, 1
        %v576 = vrot.slane %v568, 1
        %v577 = vrot.slane %v569, 1
        %v578 = vsel %vm526, %v575, %v577
        %v579 = vrot.slane %v570, 1
        %v580 = vsel %vm526, %v576, %v579
        %v587 = vsub.f32 %v561, %v575
        %v588 = vsub.f32 %v562, %v576
        %v589 = vsub.f32 %v563, %v578
        %v590 = vsub.f32 %v564, %v580
        %v591 = vsub.f32 %v565, %v577
        %v592 = vsub.f32 %v566, %v579
        %v593 = vand.u32 2147483647, %v587
        %v594 = vand.u32 2147483647, %v588
        %v595 = vand.u32 2147483647, %v589
        %v596 = vand.u32 2147483647, %v590
        %v597 = vand.u32 2147483647, %v591
        %v598 = vand.u32 2147483647, %v592
        %v599 = vadd.f32 %v361, %v366
        %v600 = vadd.f32 %v362, %v367
        %v601 = vadd.f32 %v363, %v368
        %v602 = vadd.f32 %v364, %v369
        %v603 = vadd.f32 %v599, %v371
        %v604 = vadd.f32 %v600, %v372
        %v605 = vadd.f32 %v601, %v373
        %v606 = vadd.f32 %v602, %v374
        %v607 = vmul.f32 %v603, 0.33333334
        %v608 = vmul.f32 %v604, 0.33333334
        %v609 = vmul.f32 %v605, 0.33333334
        %v610 = vmul.f32 %v606, 0.33333334
        %v611 = vsub.f32 %v361, %v607
        %v612 = vsub.f32 %v362, %v608
        %v613 = vsub.f32 %v363, %v609
        %v614 = vsub.f32 %v364, %v610
        %v615 = vmul.f32 %v611, %v611
        %v616 = vmul.f32 %v612, %v612
        %v617 = vmul.f32 %v613, %v613
        %v618 = vmul.f32 %v614, %v614
        %v619 = vsub.f32 %v366, %v607
        %v620 = vsub.f32 %v367, %v608
        %v621 = vsub.f32 %v368, %v609
        %v622 = vsub.f32 %v369, %v610
        %v623 = vmul.f32 %v619, %v619
        %v624 = vmul.f32 %v620, %v620
        %v625 = vmul.f32 %v621, %v621
        %v626 = vmul.f32 %v622, %v622
        %v627 = vadd.f32 %v615, %v623
        %v628 = vadd.f32 %v616, %v624
        %v629 = vadd.f32 %v617, %v625
        %v630 = vadd.f32 %v618, %v626
        %v631 = vsub.f32 %v371, %v607
        %v632 = vsub.f32 %v372, %v608
        %v633 = vsub.f32 %v373, %v609
        %v634 = vsub.f32 %v374, %v610
        %v635 = vmul.f32 %v631, %v631
        %v636 = vmul.f32 %v632, %v632
        %v637 = vmul.f32 %v633, %v633
        %v638 = vmul.f32 %v634, %v634
        %v639 = vadd.f32 %v627, %v635
        %v640 = vadd.f32 %v628, %v636
        %v641 = vadd.f32 %v629, %v637
        %v642 = vadd.f32 %v630, %v638
        %v643 = vmul.f32 %v639, 0.33333334
        %v644 = vmul.f32 %v640, 0.33333334
        %v645 = vmul.f32 %v641, 0.33333334
        %v646 = vmul.f32 %v642, 0.33333334
        %v647 = vrsqrt.pop %v643
        %v648 = vmul.f32 %v647, %v643
        %v649 = vmul.f32 %v648, %v647
        %v650 = vmul.f32 0.5, %v649
        %v651 = vsub.f32 1.5, %v650
        %v652 = vmul.f32 %v647, %v651
        %v653 = vmul.f32 %v643, %v652
        %vm654 = vcmp.eq.f32.partialorder %v643, inf
        %v655 = vsel %vm654, %v643, %v653
        %vm656 = vcmp.eq.f32.partialorder %v643, 0.0
        %v657 = vand.u32 %v643, 2147483648
        %v658 = vsel %vm656, %v657, %v655
        %v659 = vrsqrt.pop %v644
        %v660 = vmul.f32 %v659, %v644
        %v661 = vmul.f32 %v660, %v659
        %v662 = vmul.f32 0.5, %v661
        %v663 = vsub.f32 1.5, %v662
        %v664 = vmul.f32 %v659, %v663
        %v665 = vmul.f32 %v644, %v664
        %vm666 = vcmp.eq.f32.partialorder %v644, inf
        %v667 = vsel %vm666, %v644, %v665
        %vm668 = vcmp.eq.f32.partialorder %v644, 0.0
        %v669 = vand.u32 %v644, 2147483648
        %v670 = vsel %vm668, %v669, %v667
        %v671 = vrsqrt.pop %v645
        %v672 = vmul.f32 %v671, %v645
        %v673 = vmul.f32 %v672, %v671
        %v674 = vmul.f32 0.5, %v673
        %v675 = vsub.f32 1.5, %v674
        %v676 = vmul.f32 %v671, %v675
        %v677 = vmul.f32 %v645, %v676
        %vm678 = vcmp.eq.f32.partialorder %v645, inf
        %v679 = vsel %vm678, %v645, %v677
        %vm680 = vcmp.eq.f32.partialorder %v645, 0.0
        %v681 = vand.u32 %v645, 2147483648
        %v682 = vsel %vm680, %v681, %v679
        %v683 = vrsqrt.pop %v646
        %v684 = vmul.f32 %v683, %v646
        %v685 = vmul.f32 %v684, %v683
        %v686 = vmul.f32 0.5, %v685
        %v687 = vsub.f32 1.5, %v686
        %v688 = vmul.f32 %v683, %v687
        %v689 = vmul.f32 %v646, %v688
        %vm690 = vcmp.eq.f32.partialorder %v646, inf
        %v691 = vsel %vm690, %v646, %v689
        %vm692 = vcmp.eq.f32.partialorder %v646, 0.0
        %v693 = vand.u32 %v646, 2147483648
        %v694 = vsel %vm692, %v693, %v691
        %s695 = sld [smem:[#allocation3]]
        %v696 = vstv %s695
        %v697 = vsub.f32 %v391, %v696
        %v698 = vsub.f32 %v392, %v696
        %v699 = vsub.f32 %v393, %v696
        %v700 = vsub.f32 %v394, %v696
        %v701 = vmul.f32 %v697, %v697
        %v702 = vmul.f32 %v698, %v698
        %v703 = vmul.f32 %v699, %v699
        %v704 = vmul.f32 %v700, %v700
        %v705 = vsub.f32 0.0, %v701
        %v706 = vsub.f32 0.0, %v702
        %v707 = vsub.f32 0.0, %v703
        %v708 = vsub.f32 0.0, %v704
        %v709 = vmul.f32 %v705, 12.5
        %v710 = vmul.f32 %v706, 12.5
        %v711 = vmul.f32 %v707, 12.5
        %v712 = vmul.f32 %v708, 12.5
        %v713 = vmul.f32 %v709, 1.442695
        %v714 = vpow.pop %v713
        %v715 = vmul.f32 %v710, 1.442695
        %v716 = vpow.pop %v715
        %v717 = vmul.f32 %v711, 1.442695
        %v718 = vpow.pop %v717
        %v719 = vmul.f32 %v712, 1.442695
        %v720 = vpow.pop %v719
        %v725 = vrot.slane %v658, 1
        %v726 = vrot.slane %v670, 1
        %v727 = vrot.slane %v682, 1
        %v728 = vsel %vm526, %v725, %v727
        %v729 = vrot.slane %v694, 1
        %v730 = vsel %vm526, %v726, %v729
        %v737 = vmul.f32 %v593, %v725
        %v738 = vmul.f32 %v594, %v726
        %v739 = vmul.f32 %v595, %v728
        %v740 = vmul.f32 %v596, %v730
        %v741 = vmul.f32 %v597, %v727
        %v742 = vmul.f32 %v598, %v729
        %v747 = vrot.slane %v714, 1
        %v748 = vrot.slane %v716, 1
        %v749 = vrot.slane %v718, 1
        %v750 = vsel %vm526, %v747, %v749
        %v751 = vrot.slane %v720, 1
        %v752 = vsel %vm526, %v748, %v751
        %v759 = vmul.f32 %v737, %v747
        %v760 = vmul.f32 %v738, %v748
        %v761 = vmul.f32 %v739, %v750
        %v762 = vmul.f32 %v740, %v752
        %v763 = vmul.f32 %v741, %v749
        %v764 = vmul.f32 %v742, %v751
        %vm771 = vcmask 1040384
        %v772 = vrot.slane %v759, 7
        %v773 = vrot.slane %v761, 7
        %v774 = vsel %vm771, %v772, %v773
        %v775 = vrot.slane %v760, 7
        %v776 = vrot.slane %v762, 7
        %v777 = vsel %vm771, %v775, %v776
        %v778 = vrot.slane %v763, 7
        %v779 = vsel %vm771, %v773, %v778
        %v780 = vrot.slane %v764, 7
        %v781 = vsel %vm771, %v776, %v780
        %786 = vst [vmem:[%s350] sm:$0xff] %v774
        %787 = vst [vmem:[%s350 + $0x8] sm:$0xff] %v777
        %788 = vst [vmem:[%s350 + $0x10] sm:$0xff] %v779
        %789 = vst [vmem:[%s350 + $0x18] sm:$0xff] %v781
        %s790 = sand.u32 %s168, 1
        %s791 = scalar_lea.sflag [#allocation6], %s790
        %s792 = sand.u32 %s168, 1
        %s793 = smul.addr %s792, 32
        %s794 = scalar_lea.vmem [#allocation10], %s793
        // Predicated region
        $region49: #{tpu_custom_call.1} parent=35 // pred_check
          %p795 = pneg %p178
        $region50: #{tpu_custom_call.1} parent=35 // pred_check_branch
          %797 = sbr.rel (%p795) target = $region52
        $region51: #{tpu_custom_call.1} parent=35 // pred_region
          %s798 = smul.u32 2, %s30
          %800 = vsyncadd %s791, 0
          %s801 = smul.addr %s798, 2
          %s802 = smul.addr %s29, 4
          %s803 = sadd.s32 %s801, %s802
          %s804 = smul.addr %s803, 8
          %s805 = scalar_lea.hbm %s4, %s804
          %s806 = sshll.u32 %s794, 4
          %s807 = int_to_ptr.vmem [resolvable:$true] %s806
          %s808 = sshll.u32 %s805, 4
          %s809 = int_to_ptr.hbm [resolvable:$true] %s808
          %814 = dma.vmem_to_hbm [thread:$0]  %s807, 512, %s809, %s791, 256, 256, 16
        $region52: #{tpu_custom_call.1} parent=35 // pred_fallthru
          _
      $region36: #{tpu_custom_call.1} parent=5 // pred_fallthru
        _
      %p815 = scmp.le.s32.totalorder 2, %s20
      // Predicated region
      $region53: #{tpu_custom_call.1} parent=5 // pred_check
        %p816 = pneg %p815
      $region54: #{tpu_custom_call.1} parent=5 // pred_check_branch
        %818 = sbr.rel (%p816) target = $region56
      $region55: #{tpu_custom_call.1} parent=5 // pred_region
        %s819 = ssub.s32 %s20, 2
        // Predicated region
        $region57: #{tpu_custom_call.1} parent=55 // pred_check
          %p820 = pneg %p184
        $region58: #{tpu_custom_call.1} parent=55 // pred_check_branch
          %822 = sbr.rel (%p820) target = $region60
        $region59: #{tpu_custom_call.1} parent=55 // pred_region
          %s823 = sand.u32 %s169, 1
          %s824 = scalar_lea.sflag [#allocation6], %s823
          %s825 = sand.u32 %s169, 1
          %s826 = smul.addr %s825, 32
          %s827 = scalar_lea.vmem [#allocation10], %s826
          %829 = dma.done %s824, 512
        $region60: #{tpu_custom_call.1} parent=55 // pred_fallthru
          _
      $region56: #{tpu_custom_call.1} parent=5 // pred_fallthru
        _
    $region6: #{tpu_custom_call.1} parent=1 // loop_footer
      %s24 = sadd.s32 1, %s20
    $region7: #{tpu_custom_call.1} parent=1 // loop_footer_branch
      %19 = sbr.rel target = $region3
    $region8: #{tpu_custom_call.1} parent=1 // loop_exit
      _
    %830 = vsyncpa [#allocation5], 1
    %s831 = scalar_lea.sflag [#allocation5], 1
    %832 = vsyncpa %s831, 1
    %833 = vsyncpa [#allocation8], 1
    %s834 = scalar_lea.sflag [#allocation8], 1
    %835 = vsyncpa %s834, 1
    %836 = vsyncpa [#allocation6], 1
    %s837 = scalar_lea.sflag [#allocation6], 1
    %838 = vsyncpa %s837, 1

</llo_original>
